<compile_context>
chip_gen: v5e
topology: v5e:2x2
jax: 0.10.0
libtpu: 0.0.40
codegen_flags: <defaults>
</compile_context>

<pallas_src>
import jax
import jax.numpy as jnp
import numpy as np
from jax.experimental import pallas as pl
from jax.experimental.pallas import tpu as pltpu

# ---- problem configuration (small, consistent with the module) --------------
BATCH       = 2
FEATURE_DIM = 4      # in_channels of conv1 / resample
FILTERS     = 8      # out_channels of conv3 / resample (!= FEATURE_DIM -> resample path taken)
SEQ_LEN     = 16     # time steps
KERNEL_SIZE = 3
DILATION    = 2
HIDDEN      = 13     # hard-coded 13 in the module
PADDING     = (KERNEL_SIZE - 1) * DILATION
BN_EPS      = 1e-5

# ---- packed-parameter slab layout (all offsets are static, 8-row aligned) ---
H_PAD     = 16                          # HIDDEN padded to the 8-sublane grid
NT        = BATCH * SEQ_LEN             # lane-packed time extent (32)
WA_ROWS   = H_PAD + FILTERS             # 24: fused [conv1(16) ; resample(8)]
R_A       = 0                           # rows  0:24  W_A (24,4) lanes 0:4, bias lane 4
R_W2      = WA_ROWS                     # rows 24:40  W2 (16,48) lanes 0:48, bias lane 48
R_W3      = R_W2 + H_PAD                # rows 40:48  W3 (8,16)  lanes 0:16, bias lane 16
R_M       = R_W3 + FILTERS              # rows 48:50  causal 0/1 masks (2, NT)
N_MASKS   = KERNEL_SIZE - 1             # taps with shift > 0
SLAB_ROWS = ((R_M + N_MASKS + 7) // 8) * 8   # 56
SLAB_COLS = 128
BA_COL    = FEATURE_DIM                 # bias column of section A
B2_COL    = KERNEL_SIZE * H_PAD         # 48
B3_COL    = H_PAD                       # 16


# -----------------------------------------------------------------------------
# Pallas kernel: the whole block, both batch samples, one invocation.
# -----------------------------------------------------------------------------
def _tab_kernel(x_ref, p_ref, o_ref):
    # Pack the batch along the lane axis: (C_in, N*T).  Time stays on lanes so
    # the causal shifts are cheap lane rolls and the output stays NCL-native.
    x = jnp.concatenate([x_ref[n] for n in range(BATCH)], axis=1)

    # Fused conv1 (k=1, +folded BN1) and resample (1x1 conv): one MXU matmul
    # against the shared RHS x, split at the sublane-aligned row-16 boundary.
    w_a = p_ref[pl.ds(R_A, WA_ROWS), pl.ds(0, FEATURE_DIM)]        # (24, 4)
    b_a = p_ref[pl.ds(R_A, WA_ROWS), pl.ds(BA_COL, 1)]             # (24, 1)
    h_a = jnp.dot(w_a, x, preferred_element_type=jnp.float32) + b_a
    h1    = jnp.maximum(h_a[0:H_PAD, :], 0.0)                      # (16, NT) conv1+BN1+ReLU
    ident = h_a[H_PAD:WA_ROWS, :]                                  # (8,  NT) resample branch

    # conv2: dilated *causal* conv (padding=(k-1)*d then Chomp1d) + BN2 + ReLU.
    #   y[:, t] = sum_j W2[j] @ h1[:, t - (k-1-j)*d]   (zero where index < 0)
    # All taps fused into a single K = 3*H_PAD matmul.  Each shifted tap is an
    # XLU lane-roll of h1 multiplied by a precomputed 0/1 mask row (zeros the
    # first `shift` steps of each sample: causal padding + kills roll
    # wrap-around and cross-sample leakage from the lane packing).
    taps = []
    for j in range(KERNEL_SIZE):                                   # static, k is tiny
        shift = (KERNEL_SIZE - 1 - j) * DILATION
        if shift == 0:
            taps.append(h1)
        else:
            rolled = pltpu.roll(h1, shift, axis=1)                 # t <- t - shift
            mask = p_ref[pl.ds(R_M + j, 1), pl.ds(0, NT)]          # (1, NT) 0/1
            taps.append(rolled * mask)
    h_cat = jnp.concatenate(taps, axis=0)                          # (48, NT), 16-row aligned

    w2 = p_ref[pl.ds(R_W2, H_PAD), pl.ds(0, KERNEL_SIZE * H_PAD)]  # (16, 48)
    b2 = p_ref[pl.ds(R_W2, H_PAD), pl.ds(B2_COL, 1)]               # (16, 1)
    h2 = jnp.maximum(
        jnp.dot(w2, h_cat, preferred_element_type=jnp.float32) + b2, 0.0)

    # conv3 (k=1) + folded BN3 + ReLU, then the block's Sigmoid gate.
    w3 = p_ref[pl.ds(R_W3, FILTERS), pl.ds(0, H_PAD)]              # (8, 16)
    b3 = p_ref[pl.ds(R_W3, FILTERS), pl.ds(B3_COL, 1)]             # (8, 1)
    h3 = jnp.maximum(
        jnp.dot(w3, h2, preferred_element_type=jnp.float32) + b3, 0.0)
    gate = jax.nn.sigmoid(h3)

    out = (gate * ident).astype(o_ref.dtype)                       # (FILTERS, NT)
    for n in range(BATCH):                                         # unpack lanes -> NCL
        o_ref[n] = out[:, n * SEQ_LEN:(n + 1) * SEQ_LEN]


@jax.jit
def temporal_aware_block(x_ncl, slab):
    """x_ncl: (N, C_in, T) float32 (PyTorch layout). Returns (N, FILTERS, T)."""
    n, c_in, t = x_ncl.shape
    assert n == BATCH and c_in == FEATURE_DIM and t == SEQ_LEN
    assert slab.shape == (SLAB_ROWS, SLAB_COLS)

    vmem = lambda: pl.BlockSpec(memory_space=pltpu.MemorySpace.VMEM)
    return pl.pallas_call(
        _tab_kernel,
        out_shape=jax.ShapeDtypeStruct((n, FILTERS, t), jnp.float32),
        in_specs=[vmem(), vmem()],
        out_specs=vmem(),
    )(x_ncl.astype(jnp.float32), slab.astype(jnp.float32))


# -----------------------------------------------------------------------------
# Deterministic parameter construction (+ BatchNorm folding).
# -----------------------------------------------------------------------------
def make_params(key):
    ks = jax.random.split(key, 20)

    def rnd(k, shape, scale=0.3):
        return scale * jax.random.normal(k, shape, jnp.float32)

    w1 = rnd(ks[0], (HIDDEN, FEATURE_DIM))                # conv1: (out, in)
    b1 = rnd(ks[1], (HIDDEN,), 0.1)
    w2 = rnd(ks[2], (KERNEL_SIZE, HIDDEN, HIDDEN))        # conv2: (tap, out, in)
    b2 = rnd(ks[3], (HIDDEN,), 0.1)
    w3 = rnd(ks[4], (FILTERS, HIDDEN))                    # conv3: (out, in)
    b3 = rnd(ks[5], (FILTERS,), 0.1)
    wr = rnd(ks[6], (FILTERS, FEATURE_DIM))               # resample: (out, in)
    br = rnd(ks[7], (FILTERS,), 0.1)

    # BatchNorm (eval mode) parameters, folded into scale/shift then into convs
    def bn_fold(kg, kb, km, kv, c):
        gamma = 1.0 + rnd(kg, (c,), 0.1)
        beta  = rnd(kb, (c,), 0.1)
        mean  = rnd(km, (c,), 0.1)
        var   = jnp.abs(rnd(kv, (c,), 0.1)) + 0.5
        scale = gamma / jnp.sqrt(var + BN_EPS)
        shift = beta - mean * scale
        return scale, shift

    s1, t1 = bn_fold(ks[8],  ks[9],  ks[10], ks[11], HIDDEN)
    s2, t2 = bn_fold(ks[12], ks[13], ks[14], ks[15], HIDDEN)
    s3, t3 = bn_fold(ks[16], ks[17], ks[18], ks[19], FILTERS)

    w1f = w1 * s1[:, None]
    b1f = (b1 * s1 + t1)[:, None]                         # (13, 1) -> lane bcast
    w2f = w2 * s2[None, :, None]
    # taps stacked along the contraction dim; tap j <-> time shift (K-1-j)*D
    w2s = jnp.concatenate([w2f[j] for j in range(KERNEL_SIZE)], axis=1)  # (13, 39)
    b2f = (b2 * s2 + t2)[:, None]
    w3f = w3 * s3[:, None]
    b3f = (b3 * s3 + t3)[:, None]
    brf = br[:, None]
    return (w1f, b1f, w2s, b2f, w3f, b3f, wr, brf)


# -----------------------------------------------------------------------------
# Pack everything into ONE pre-padded parameter slab (HIDDEN padded 13 -> 16,
# biases in the lane right after the weight columns, causal masks as 0/1 rows).
# -----------------------------------------------------------------------------
def pack_slab(params):
    w1f, b1f, w2s, b2f, w3f, b3f, wr, brf = params
    slab = jnp.zeros((SLAB_ROWS, SLAB_COLS), jnp.float32)

    # Section A: fused [conv1 (padded to 16 rows) ; resample (8 rows)]
    slab = slab.at[R_A:R_A + HIDDEN, 0:FEATURE_DIM].set(w1f)
    slab = slab.at[R_A:R_A + HIDDEN, BA_COL].set(b1f[:, 0])
    slab = slab.at[R_A + H_PAD:R_A + WA_ROWS, 0:FEATURE_DIM].set(wr)
    slab = slab.at[R_A + H_PAD:R_A + WA_ROWS, BA_COL].set(brf[:, 0])

    # Section W2: taps stacked along contraction, each in-block padded 13 -> 16
    for j in range(KERNEL_SIZE):
        blk = w2s[:, j * HIDDEN:(j + 1) * HIDDEN]          # (13, 13)
        slab = slab.at[R_W2:R_W2 + HIDDEN, j * H_PAD:j * H_PAD + HIDDEN].set(blk)
    slab = slab.at[R_W2:R_W2 + HIDDEN, B2_COL].set(b2f[:, 0])

    # Section W3
    slab = slab.at[R_W3:R_W3 + FILTERS, 0:HIDDEN].set(w3f)
    slab = slab.at[R_W3:R_W3 + FILTERS, B3_COL].set(b3f[:, 0])

    # Causal 0/1 mask rows (one per tap with shift > 0), over the lane-packed time
    t_local = jnp.arange(NT) % SEQ_LEN
    for j in range(N_MASKS):
        shift = (KERNEL_SIZE - 1 - j) * DILATION
        slab = slab.at[R_M + j, 0:NT].set((t_local >= shift).astype(jnp.float32))
    return slab


# -----------------------------------------------------------------------------
# Pure-JAX reference (independent formulation: real dilated conv + Chomp1d).
# -----------------------------------------------------------------------------
def reference(x_ncl, params):
    w1, b1, w2s, b2, w3, b3, wr, br = params

    def conv1x1(x, w, b):                                  # x:(N,C,T) w:(O,C) b:(O,1)
        return jnp.einsum('oc,nct->not', w, x) + b[None]

    h1 = jax.nn.relu(conv1x1(x_ncl, w1, b1))
    # rebuild the (O, I, K) dilated-conv kernel from the tap-stacked matrix
    w2 = jnp.stack([w2s[:, j * HIDDEN:(j + 1) * HIDDEN] for j in range(KERNEL_SIZE)],
                   axis=-1)
    y = jax.lax.conv_general_dilated(
        h1, w2, window_strides=(1,), padding=[(PADDING, PADDING)],
        rhs_dilation=(DILATION,), dimension_numbers=('NCH', 'OIH', 'NCH'))
    h2 = jax.nn.relu(y[:, :, :SEQ_LEN] + b2[None])         # Chomp1d + BN2 + ReLU
    h3 = jax.nn.relu(conv1x1(h2, w3, b3))
    ident = conv1x1(x_ncl, wr, br)
    return jax.nn.sigmoid(h3) * ident


if __name__ == "__main__":
    key = jax.random.PRNGKey(0)
    k_x, k_p = jax.random.split(key)
    x = jax.random.normal(k_x, (BATCH, FEATURE_DIM, SEQ_LEN), jnp.float32)
    params = make_params(k_p)
    slab = pack_slab(params)

    out = jax.block_until_ready(temporal_aware_block(x, slab))
    ref = jax.block_until_ready(reference(x, params))

    assert out.shape == (BATCH, FILTERS, SEQ_LEN), out.shape
    np.testing.assert_allclose(np.asarray(out), np.asarray(ref), rtol=2e-5, atol=2e-5)

    print("KERNEL_OK")
</pallas_src>

<mosaic_0001>
module attributes {stable_mosaic.version = 11 : i64} {
  func.func @_tab_kernel(%arg0: memref<2x4x16xf32, #tpu.memory_space<vmem>>, %arg1: memref<56x128xf32, #tpu.memory_space<vmem>>, %arg2: memref<2x8x16xf32, #tpu.memory_space<vmem>>) attributes {dimension_semantics = [], scalar_prefetch = 0 : i64, scratch_operands = 0 : i64, tpu.core_type = #tpu.core_type<tc>} {
    %c0 = arith.constant 0 : index
    %c0_0 = arith.constant 0 : index
    %c0_1 = arith.constant 0 : index
    %0 = vector.load %arg0[%c0, %c0_0, %c0_1] : memref<2x4x16xf32, #tpu.memory_space<vmem>>, vector<1x4x16xf32>
    %1 = vector.shape_cast %0 : vector<1x4x16xf32> to vector<4x16xf32>
    %c1 = arith.constant 1 : index
    %c0_2 = arith.constant 0 : index
    %c0_3 = arith.constant 0 : index
    %2 = vector.load %arg0[%c1, %c0_2, %c0_3] : memref<2x4x16xf32, #tpu.memory_space<vmem>>, vector<1x4x16xf32>
    %3 = vector.shape_cast %2 : vector<1x4x16xf32> to vector<4x16xf32>
    %4 = tpu.concatenate %1, %3 in 1 : vector<4x16xf32>, vector<4x16xf32> -> vector<4x32xf32>
    %c0_4 = arith.constant 0 : index
    %c0_5 = arith.constant 0 : index
    %5 = vector.load %arg1[%c0_4, %c0_5] : memref<56x128xf32, #tpu.memory_space<vmem>>, vector<24x4xf32>
    %c0_6 = arith.constant 0 : index
    %c4 = arith.constant 4 : index
    %6 = vector.load %arg1[%c0_6, %c4] : memref<56x128xf32, #tpu.memory_space<vmem>>, vector<24x1xf32>
    %cst = arith.constant dense<0.000000e+00> : vector<24x32xf32>
    %7 = tpu.matmul %5, %4, %cst {dimension_numbers = #tpu.dot_dimension_numbers<[1], [0], [0], [1], [0, 0, 1, 1], [], []>} : vector<24x4xf32>, vector<4x32xf32>, vector<24x32xf32> -> vector<24x32xf32>
    %8 = vector.broadcast %6 : vector<24x1xf32> to vector<24x32xf32>
    %9 = arith.addf %7, %8 : vector<24x32xf32>
    %10 = vector.extract_strided_slice %9 {offsets = [0, 0], sizes = [16, 32], strides = [1, 1]} : vector<24x32xf32> to vector<16x32xf32>
    %cst_7 = arith.constant 0.000000e+00 : f32
    %11 = vector.broadcast %cst_7 : f32 to vector<16x32xf32>
    %12 = arith.maximumf %10, %11 : vector<16x32xf32>
    %13 = vector.extract_strided_slice %9 {offsets = [16, 0], sizes = [8, 32], strides = [1, 1]} : vector<24x32xf32> to vector<8x32xf32>
    %c4_i32 = arith.constant 4 : i32
    %14 = tpu.dynamic_rotate %12 by %c4_i32 dim 1 : vector<16x32xf32>, i32 -> vector<16x32xf32>
    %c48 = arith.constant 48 : index
    %c0_8 = arith.constant 0 : index
    %15 = vector.load %arg1[%c48, %c0_8] : memref<56x128xf32, #tpu.memory_space<vmem>>, vector<1x32xf32>
    %16 = vector.broadcast %15 : vector<1x32xf32> to vector<16x32xf32>
    %17 = arith.mulf %14, %16 : vector<16x32xf32>
    %c2_i32 = arith.constant 2 : i32
    %18 = tpu.dynamic_rotate %12 by %c2_i32 dim 1 : vector<16x32xf32>, i32 -> vector<16x32xf32>
    %c49 = arith.constant 49 : index
    %c0_9 = arith.constant 0 : index
    %19 = vector.load %arg1[%c49, %c0_9] : memref<56x128xf32, #tpu.memory_space<vmem>>, vector<1x32xf32>
    %20 = vector.broadcast %19 : vector<1x32xf32> to vector<16x32xf32>
    %21 = arith.mulf %18, %20 : vector<16x32xf32>
    %22 = tpu.concatenate %17, %21, %12 in 0 : vector<16x32xf32>, vector<16x32xf32>, vector<16x32xf32> -> vector<48x32xf32>
    %c24 = arith.constant 24 : index
    %c0_10 = arith.constant 0 : index
    %23 = vector.load %arg1[%c24, %c0_10] : memref<56x128xf32, #tpu.memory_space<vmem>>, vector<16x48xf32>
    %c24_11 = arith.constant 24 : index
    %c48_12 = arith.constant 48 : index
    %24 = vector.load %arg1[%c24_11, %c48_12] : memref<56x128xf32, #tpu.memory_space<vmem>>, vector<16x1xf32>
    %cst_13 = arith.constant dense<0.000000e+00> : vector<16x32xf32>
    %25 = tpu.matmul %23, %22, %cst_13 {dimension_numbers = #tpu.dot_dimension_numbers<[1], [0], [0], [1], [0, 0, 1, 1], [], []>} : vector<16x48xf32>, vector<48x32xf32>, vector<16x32xf32> -> vector<16x32xf32>
    %26 = vector.broadcast %24 : vector<16x1xf32> to vector<16x32xf32>
    %27 = arith.addf %25, %26 : vector<16x32xf32>
    %cst_14 = arith.constant 0.000000e+00 : f32
    %28 = vector.broadcast %cst_14 : f32 to vector<16x32xf32>
    %29 = arith.maximumf %27, %28 : vector<16x32xf32>
    %c40 = arith.constant 40 : index
    %c0_15 = arith.constant 0 : index
    %30 = vector.load %arg1[%c40, %c0_15] : memref<56x128xf32, #tpu.memory_space<vmem>>, vector<8x16xf32>
    %c40_16 = arith.constant 40 : index
    %c16 = arith.constant 16 : index
    %31 = vector.load %arg1[%c40_16, %c16] : memref<56x128xf32, #tpu.memory_space<vmem>>, vector<8x1xf32>
    %cst_17 = arith.constant dense<0.000000e+00> : vector<8x32xf32>
    %32 = tpu.matmul %30, %29, %cst_17 {dimension_numbers = #tpu.dot_dimension_numbers<[1], [0], [0], [1], [0, 0, 1, 1], [], []>} : vector<8x16xf32>, vector<16x32xf32>, vector<8x32xf32> -> vector<8x32xf32>
    %33 = vector.broadcast %31 : vector<8x1xf32> to vector<8x32xf32>
    %34 = arith.addf %32, %33 : vector<8x32xf32>
    %cst_18 = arith.constant 0.000000e+00 : f32
    %35 = vector.broadcast %cst_18 : f32 to vector<8x32xf32>
    %36 = arith.maximumf %34, %35 : vector<8x32xf32>
    %37 = arith.negf %36 : vector<8x32xf32>
    %38 = math.exp %37 : vector<8x32xf32>
    %cst_19 = arith.constant 1.000000e+00 : f32
    %39 = vector.broadcast %cst_19 : f32 to vector<8x32xf32>
    %40 = arith.addf %39, %38 : vector<8x32xf32>
    %41 = arith.divf %39, %40 : vector<8x32xf32>
    %42 = arith.mulf %41, %13 : vector<8x32xf32>
    %43 = vector.extract_strided_slice %42 {offsets = [0, 0], sizes = [8, 16], strides = [1, 1]} : vector<8x32xf32> to vector<8x16xf32>
    %c0_20 = arith.constant 0 : index
    %c0_21 = arith.constant 0 : index
    %c0_22 = arith.constant 0 : index
    %44 = vector.load %arg2[%c0_20, %c0_21, %c0_22] : memref<2x8x16xf32, #tpu.memory_space<vmem>>, vector<1x8x16xf32>
    %45 = vector.shape_cast %44 : vector<1x8x16xf32> to vector<8x16xf32>
    %46 = vector.shape_cast %43 : vector<8x16xf32> to vector<1x8x16xf32>
    tpu.vector_store %arg2[%c0_20, %c0_21, %c0_22], %46 {strides = array<i32>} : memref<2x8x16xf32, #tpu.memory_space<vmem>>, vector<1x8x16xf32>,
    %47 = vector.extract_strided_slice %42 {offsets = [0, 16], sizes = [8, 16], strides = [1, 1]} : vector<8x32xf32> to vector<8x16xf32>
    %c1_23 = arith.constant 1 : index
    %c0_24 = arith.constant 0 : index
    %c0_25 = arith.constant 0 : index
    %48 = vector.load %arg2[%c1_23, %c0_24, %c0_25] : memref<2x8x16xf32, #tpu.memory_space<vmem>>, vector<1x8x16xf32>
    %49 = vector.shape_cast %48 : vector<1x8x16xf32> to vector<8x16xf32>
    %50 = vector.shape_cast %47 : vector<8x16xf32> to vector<1x8x16xf32>
    tpu.vector_store %arg2[%c1_23, %c0_24, %c0_25], %50 {strides = array<i32>} : memref<2x8x16xf32, #tpu.memory_space<vmem>>, vector<1x8x16xf32>,
    return
  }
}

</mosaic_0001>

<llo_original>
// kernel: temporal_aware_block.1
$region0: #{temporal_aware_block.1}
  #allocation0 [shape = 'u32[]', space=smem, size = 0x4, offset = 0x4, fixed_abs, tag = 'smem constant byte address 0x4 - core index']
  #allocation1 [shape = 'u32[72,128]{1,0:T(1,128)}', space=vmem, size = 0x9000, scoped, tag = 'internal scratch']
  %s0 = inlined_call_operand.hbm [shape: f32[2,4,16], index: 0, kind: input, shape index: {}]
  %s1 = inlined_call_operand.hbm [shape: f32[56,128], index: 1, kind: input, shape index: {}]
  %s2 = inlined_call_operand.hbm [shape: f32[2,8,16], index: 2, kind: output, shape index: {}]
  %s3 = sld [smem:[#allocation0]]
  $region26: #{temporal_aware_block.1} parent=0
    _
  %s5 = ssub.s32 1, %s3
  %s6 = scalar_select 0, %s5, %s3
  $region1: #{temporal_aware_block.1} parent=0
    #allocation2 [shape = 'u8[4096]{0}', space=vmem, size = 0x1000, scoped, tag = 'input window, operand 0, single buffered']
    #allocation3 [shape = 's32[1]{0}', space=sflag, size = 0x4, scoped, tag = 'scoped memory for temporal_aware_block.1']
    #allocation4 [shape = 's32[1]{0}', space=sflag, size = 0x4, scoped, tag = 'scoped memory for temporal_aware_block.1']
    #allocation5 [shape = 'u8[28672]{0}', space=vmem, size = 0x7000, scoped, tag = 'input window, operand 1, single buffered']
    #allocation6 [shape = 's32[1]{0}', space=sflag, size = 0x4, scoped, tag = 'scoped memory for temporal_aware_block.1']
    #allocation7 [shape = 'u8[8192]{0}', space=vmem, size = 0x2000, scoped, tag = 'output window, operand 0, single buffered']
    %7 = vsyncpa [#allocation3], 0
    %8 = vsyncpa [#allocation6], 0
    %9 = vsyncpa [#allocation4], 0
    // Predicated region
    $region2: #{temporal_aware_block.1} parent=1 // pred_check
      _
    $region3: #{temporal_aware_block.1} parent=1 // pred_check_branch
      %11 = sbr.rel (0) target = $region5
    $region4: #{temporal_aware_block.1} parent=1 // pred_region
      %13 = vsyncadd [#allocation3], 0
      %s14 = sshll.u32 %s0, 4
      %s15 = int_to_ptr.hbm [resolvable:$true] %s14
      %s16 = sshll.u32 [#allocation2], 4
      %s17 = int_to_ptr.vmem [resolvable:$true] %s16
      %22 = dma.hbm_to_vmem [thread:$0]  %s15, 128, %s17, [#allocation3], 64, 64, 4
    $region5: #{temporal_aware_block.1} parent=1 // pred_fallthru
      _
    // Predicated region
    $region6: #{temporal_aware_block.1} parent=1 // pred_check
      _
    $region7: #{temporal_aware_block.1} parent=1 // pred_check_branch
      %24 = sbr.rel (0) target = $region9
    $region8: #{temporal_aware_block.1} parent=1 // pred_region
      %26 = vsyncadd [#allocation6], 0
      %s27 = sshll.u32 %s1, 4
      %s28 = int_to_ptr.hbm [resolvable:$true] %s27
      %s29 = sshll.u32 [#allocation5], 4
      %s30 = int_to_ptr.vmem [resolvable:$true] %s29
      %35 = dma.hbm_to_vmem [thread:$0]  %s28, 896, %s30, [#allocation6], 128, 128, 8
    $region9: #{temporal_aware_block.1} parent=1 // pred_fallthru
      _
    // Predicated region
    $region10: #{temporal_aware_block.1} parent=1 // pred_check
      _
    $region11: #{temporal_aware_block.1} parent=1 // pred_check_branch
      %37 = sbr.rel (0) target = $region13
    $region12: #{temporal_aware_block.1} parent=1 // pred_region
      %39 = dma.done [#allocation3], 128
    $region13: #{temporal_aware_block.1} parent=1 // pred_fallthru
      _
    // Predicated region
    $region14: #{temporal_aware_block.1} parent=1 // pred_check
      _
    $region15: #{temporal_aware_block.1} parent=1 // pred_check_branch
      %41 = sbr.rel (0) target = $region17
    $region16: #{temporal_aware_block.1} parent=1 // pred_region
      %43 = dma.done [#allocation6], 896
    $region17: #{temporal_aware_block.1} parent=1 // pred_fallthru
      _
    %v44 = vld [vmem:[#allocation2] sm:$0xf]
    %s45 = scalar_lea.vmem [#allocation2], 4
    %v46 = vld [vmem:[%s45] sm:$0xf]
    %48 = vrot.lane.b32.xlu0 %v46, 16
    %v49 = vpop.permute.xlu0 %48
    %vm51 = vcmask 130048
    %v52 = vsel %vm51, %v44, %v49
    %v53 = vld [vmem:[#allocation5] sm:$0xff]
    %v54 = vld [vmem:[#allocation5 + $0x8] sm:$0xff]
    %v55 = vld [vmem:[#allocation5 + $0x10] sm:$0xff]
    %57 = vset.pattern.permute.xlu0 4
    %58 = vperm.xlu0 %57, %v53
    %v59 = vpop.permute.xlu0 %58
    %62 = vset.pattern.permute.xlu0 4
    %63 = vperm.xlu0 %62, %v54
    %v64 = vpop.permute.xlu0 %63
    %67 = vset.pattern.permute.xlu0 4
    %68 = vperm.xlu0 %67, %v55
    %v69 = vpop.permute.xlu0 %68
    %vm71 = vcmask 31744
    %v72 = vsel %vm71, %v53, 0
    %v74 = vsel %vm71, %v54, 0
    %v76 = vsel %vm71, %v55, 0
    %vm78 = vcmask 1043456
    %v80 = vsel %vm78, %v52, 0
    %82 = vmatpush.msra.mxu0 0.0
    %83 = vmatpush.msra.mxu0 0.0
    %84 = vmatpush.msra.mxu0 0.0
    %85 = vmatpush.msra.mxu0 0.0
    %86 = vmatpush.msra.mxu0 0.0
    %87 = vmatpush.msra.mxu0 0.0
    %88 = vmatpush.msra.mxu0 0.0
    %89 = vmatpush.msra.mxu0 0.0
    %90 = vmatpush.msra.mxu0 0.0
    %91 = vmatpush.msra.mxu0 0.0
    %92 = vmatpush.msra.mxu0 0.0
    %93 = vmatpush.msra.mxu0 0.0
    %94 = vmatpush.msra.mxu0 0.0
    %95 = vmatpush.msra.mxu0 0.0
    %96 = vmatpush.msra.mxu0 0.0
    %97 = vmatpush.msra.mxu0 %v80
    %98 = vmatmul.f32.gmra.mxu0 %v72
    %v99 = vpop.f32.mrf.mxu0
    %v100 = vadd.f32 %v59, %v99
    %101 = vmatmul.f32.gmra.mxu0 %v74
    %v102 = vpop.f32.mrf.mxu0
    %v103 = vadd.f32 %v64, %v102
    %104 = vmatmul.f32.gmra.mxu0 %v76
    %v105 = vpop.f32.mrf.mxu0
    %v106 = vadd.f32 %v69, %v105
    %107 = vdwg.mxu0
    %v108 = vmax.f32 %v100, 0.0
    %v109 = vmax.f32 %v103, 0.0
    %vm110 = vcmask 1047808
    %111 = vrot.lane.b32.xlu0 %v108, 32
    %v112 = vpop.permute.xlu0 %111
    %v113 = vsel %vm110, %v112, %v108
    %114 = vrot.lane.b32.xlu0 %v109, 32
    %v115 = vpop.permute.xlu0 %114
    %v116 = vsel %vm110, %v115, %v109
    %117 = vrot.lane.b32.xlu0 %v113, 32
    %v118 = vpop.permute.xlu0 %117
    %119 = vrot.lane.b32.xlu0 %v116, 32
    %v120 = vpop.permute.xlu0 %119
    %v121 = vsel %vm110, %v118, %v108
    %v122 = vsel %vm110, %v120, %v109
    %v123 = vld [vmem:[#allocation5 + $0x30] sm:$0x1]
    %v124 = vperm.slane %v123, 0
    %126 = vrot.lane.b32.xlu0 %v124, 28
    %v127 = vpop.permute.xlu0 %126
    %v129 = vmul.f32 %v121, %v127
    %v130 = vmul.f32 %v122, %v127
    %v131 = vld [vmem:[#allocation5 + $0x31] sm:$0x1]
    %v132 = vperm.slane %v131, 0
    %134 = vrot.lane.b32.xlu0 %v132, 30
    %v135 = vpop.permute.xlu0 %134
    %v137 = vmul.f32 %v121, %v135
    %v138 = vmul.f32 %v122, %v135
    %141 = vrot.lane.b32.xlu0 %v137, 126
    %v142 = vpop.permute.xlu0 %141
    %143 = vrot.lane.b32.xlu0 %v138, 126
    %v144 = vpop.permute.xlu0 %143
    %147 = vrot.lane.b32.xlu0 %v108, 28
    %v148 = vpop.permute.xlu0 %147
    %149 = vrot.lane.b32.xlu0 %v109, 28
    %v150 = vpop.permute.xlu0 %149
    %v151 = vld [vmem:[#allocation5 + $0x18] sm:$0xff]
    %v152 = vld [vmem:[#allocation5 + $0x20] sm:$0xff]
    %154 = vset.pattern.permute.xlu0 48
    %155 = vperm.xlu0 %154, %v151
    %v156 = vpop.permute.xlu0 %155
    %159 = vset.pattern.permute.xlu0 48
    %160 = vperm.xlu0 %159, %v152
    %v161 = vpop.permute.xlu0 %160
    %165 = vrot.lane.b32.xlu0 %v129, 100
    %v166 = vpop.permute.xlu0 %165
    %167 = vrot.lane.b32.xlu0 %v130, 100
    %v168 = vpop.permute.xlu0 %167
    %169 = vrot.lane.b32.xlu0 %v142, 100
    %v170 = vpop.permute.xlu0 %169
    %171 = vrot.lane.b32.xlu0 %v144, 100
    %v172 = vpop.permute.xlu0 %171
    %173 = vrot.lane.b32.xlu0 %v148, 100
    %v174 = vpop.permute.xlu0 %173
    %175 = vrot.lane.b32.xlu0 %v150, 100
    %v176 = vpop.permute.xlu0 %175
    %vm183 = vcmask 392192
    %v184 = vsel %vm183, %v151, 0
    %v186 = vsel %vm183, %v152, 0
    %188 = vmatpush.msra.mxu0 0.0
    %189 = vmatpush.msra.mxu0 0.0
    %190 = vmatpush.msra.mxu0 0.0
    %191 = vmatpush.msra.mxu0 0.0
    %192 = vmatpush.msra.mxu0 0.0
    %193 = vmatpush.msra.mxu0 0.0
    %194 = vmatpush.msra.mxu0 0.0
    %195 = vmatpush.msra.mxu0 0.0
    %196 = vmatpush.msra.mxu0 0.0
    %197 = vmatpush.msra.mxu0 0.0
    %198 = vmatpush.msra.mxu0 %v176
    %199 = vmatpush.msra.mxu0 %v174
    %200 = vmatpush.msra.mxu0 %v172
    %201 = vmatpush.msra.mxu0 %v170
    %202 = vmatpush.msra.mxu0 %v168
    %203 = vmatpush.msra.mxu0 %v166
    %204 = vmatmul.f32.gmra.mxu0 %v184
    %v205 = vpop.f32.mrf.mxu0
    %v206 = vadd.f32 %v156, %v205
    %207 = vmatmul.f32.gmra.mxu0 %v186
    %v208 = vpop.f32.mrf.mxu0
    %v209 = vadd.f32 %v161, %v208
    %210 = vdwg.mxu0
    %v211 = vmax.f32 %v206, 0.0
    %v212 = vmax.f32 %v209, 0.0
    %v213 = vld [vmem:[#allocation5 + $0x28] sm:$0xff]
    %215 = vset.pattern.permute.xlu0 16
    %216 = vperm.xlu0 %215, %v213
    %v217 = vpop.permute.xlu0 %216
    %v219 = vsel %vm51, %v213, 0
    %221 = vmatpush.msra.mxu0 0.0
    %222 = vmatpush.msra.mxu0 0.0
    %223 = vmatpush.msra.mxu0 0.0
    %224 = vmatpush.msra.mxu0 0.0
    %225 = vmatpush.msra.mxu0 0.0
    %226 = vmatpush.msra.mxu0 0.0
    %227 = vmatpush.msra.mxu0 0.0
    %228 = vmatpush.msra.mxu0 0.0
    %229 = vmatpush.msra.mxu0 0.0
    %230 = vmatpush.msra.mxu0 0.0
    %231 = vmatpush.msra.mxu0 0.0
    %232 = vmatpush.msra.mxu0 0.0
    %233 = vmatpush.msra.mxu0 0.0
    %234 = vmatpush.msra.mxu0 0.0
    %235 = vmatpush.msra.mxu0 %v212
    %236 = vmatpush.msra.mxu0 %v211
    %237 = vmatmul.f32.gmra.mxu0 %v219
    %v238 = vpop.f32.mrf.mxu0
    %v239 = vadd.f32 %v217, %v238
    %240 = vdwg.mxu0
    %v241 = vmax.f32 %v239, 0.0
    %v242 = vxor.u32 %v241, 2147483648
    %v243 = vmul.f32 %v242, 1.442695
    %v244 = vpow.pop %v243
    %v245 = vadd.f32 %v244, 1.0
    %v246 = vrcp.pop %v245
    %v247 = vmul.f32 %v245, %v246
    %v248 = vsub.f32 1.0, %v247
    %v249 = vmul.f32 %v246, %v248
    %v250 = vadd.f32 %v246, %v249
    %vm251 = vweird.f32 %v245
    %vm252 = vweird.f32 %v246
    %vm253 = vmor %vm251, %vm252
    %v254 = vsel %vm253, %v246, %v250
    %v255 = vand.u32 2147483647, %v245
    %vm256 = vcmp.eq.f32.partialorder %v255, 8.507059e+37
    %v257 = vand.u32 %v245, 2147483648
    %v258 = vor.u32 1.1754944e-38, %v257
    %v259 = vsel %vm256, %v258, %v254
    %v260 = vmul.f32 1.0, %v259
    %v261 = vmul.f32 %v260, %v106
    %262 = vst.msk [vmem:[#allocation7] sm:$0xff] %vm51, %v261
    %264 = vrot.lane.b32.xlu0 %v261, 112
    %v265 = vpop.permute.xlu0 %264
    %s267 = scalar_lea.vmem [#allocation7], 8
    %268 = vst.msk [vmem:[%s267] sm:$0xff] %vm51, %v265
    // Predicated region
    $region18: #{temporal_aware_block.1} parent=1 // pred_check
      _
    $region19: #{temporal_aware_block.1} parent=1 // pred_check_branch
      %270 = sbr.rel (0) target = $region21
    $region20: #{temporal_aware_block.1} parent=1 // pred_region
      %272 = vsyncadd [#allocation4], 0
      %s273 = sshll.u32 [#allocation7], 4
      %s274 = int_to_ptr.vmem [resolvable:$true] %s273
      %s275 = sshll.u32 %s2, 4
      %s276 = int_to_ptr.hbm [resolvable:$true] %s275
      %281 = dma.vmem_to_hbm [thread:$0]  %s274, 256, %s276, [#allocation4], 128, 128, 8
    $region21: #{temporal_aware_block.1} parent=1 // pred_fallthru
      _
    // Predicated region
    $region22: #{temporal_aware_block.1} parent=1 // pred_check
      _
    $region23: #{temporal_aware_block.1} parent=1 // pred_check_branch
      %283 = sbr.rel (0) target = $region25
    $region24: #{temporal_aware_block.1} parent=1 // pred_region
      %285 = dma.done [#allocation4], 256
    $region25: #{temporal_aware_block.1} parent=1 // pred_fallthru
      _
    %286 = vsyncpa [#allocation3], 1
    %287 = vsyncpa [#allocation6], 1
    %288 = vsyncpa [#allocation4], 1

</llo_original>
